<compile_context>
chip_gen: v6e
topology: v6e:2x2x1
jax: 0.10.0
libtpu: 0.0.40
codegen_flags: <defaults>
</compile_context>

<pallas_src>
import functools

import jax
import jax.numpy as jnp
from jax import lax
from jax.experimental import pallas as pl
from jax.experimental.pallas import tpu as pltpu


# ---------------------------------------------------------------------------
# In-kernel ConvTranspose1d building block (NCW, one batch element)
# ---------------------------------------------------------------------------
def _conv_transpose_ncw(x, w_mat, *, K, stride, padding, output_padding, L_out):
    """ConvTranspose1d on a (C_in, L_in) VMEM value -> (C_out, L_out) float32.

    w_mat is the PyTorch weight (C_in, C_out, K) already flipped along K and
    reshaped to (C_out, K*C_in) (k-major columns), so the whole transposed conv
    collapses into one im2col matmul on the MXU.
    """
    C_in, L_in = x.shape
    lpad = K - 1 - padding
    rpad = K - 1 - padding + output_padding

    if stride > 1:
        # Fuse the transposed-conv zero-insertion AND the boundary padding into a
        # single selector matmul: up[c, lpad + i*stride] = x[c, i], zero elsewhere.
        Lp = (L_in - 1) * stride + 1 + lpad + rpad
        row = lax.broadcasted_iota(jnp.int32, (L_in, Lp), 0)
        col = lax.broadcasted_iota(jnp.int32, (L_in, Lp), 1)
        sel = (col == stride * row + lpad).astype(x.dtype)
        up = jnp.dot(x, sel, preferred_element_type=jnp.float32)      # (C_in, Lp)
    else:
        # stride==1: just zero-pad the length (lane) axis inside VMEM.
        parts = []
        if lpad > 0:
            parts.append(jnp.zeros((C_in, lpad), x.dtype))
        parts.append(x)
        if rpad > 0:
            parts.append(jnp.zeros((C_in, rpad), x.dtype))
        up = jnp.concatenate(parts, axis=-1) if len(parts) > 1 else x

    # im2col: fold all K taps into the contraction dim -> one MXU matmul.
    if K > 1:
        patches = jnp.concatenate([up[:, k:k + L_out] for k in range(K)], axis=0)
    else:
        patches = up[:, :L_out]
    return jnp.dot(w_mat, patches, preferred_element_type=jnp.float32)


# ---------------------------------------------------------------------------
# Fused residual-block kernel (one batch element per grid step)
# ---------------------------------------------------------------------------
def _residual_block_t_kernel(x_ref,
                             w1_ref, s1_ref, b1_ref,
                             w2_ref, s2_ref, b2_ref,
                             w3_ref, s3_ref, b3_ref,
                             *rest,
                             ks, stride, has_downsample):
    if has_downsample:
        wd_ref, sd_ref, bd_ref, out_ref = rest
    else:
        (out_ref,) = rest

    x = x_ref[0]                         # (C_in, L)   NCW: channels x length
    L_in = x.shape[1]
    L_out = out_ref.shape[2]
    op = stride - 1 if stride > 1 else 0

    # conv1: ConvTranspose1d(k1, stride=1, pad=k1//2) + BN + ReLU
    h = _conv_transpose_ncw(x, w1_ref[...], K=ks[0], stride=1,
                            padding=ks[0] // 2, output_padding=0, L_out=L_in)
    h = jnp.maximum(h * s1_ref[...] + b1_ref[...], 0.0)

    # conv2: ConvTranspose1d(k2, stride, pad=k2//2, output_padding=op) + BN + ReLU
    #        (+ Dropout(0.2) == identity in eval mode)
    h = _conv_transpose_ncw(h, w2_ref[...], K=ks[1], stride=stride,
                            padding=ks[1] // 2, output_padding=op, L_out=L_out)
    h = jnp.maximum(h * s2_ref[...] + b2_ref[...], 0.0)

    # conv3: ConvTranspose1d(k3, stride=1, pad=k3//2) + BN  (ReLU after residual add)
    h = _conv_transpose_ncw(h, w3_ref[...], K=ks[2], stride=1,
                            padding=ks[2] // 2, output_padding=0, L_out=L_out)
    h = h * s3_ref[...] + b3_ref[...]

    # Residual branch — computed in VMEM, never materialised in HBM.
    if has_downsample:
        r = _conv_transpose_ncw(x, wd_ref[...], K=1, stride=stride,
                                padding=0, output_padding=op, L_out=L_out)
        r = r * sd_ref[...] + bd_ref[...]
    else:
        r = x.astype(jnp.float32)        # identity shortcut (stride==1, Cin==Cout)

    out_ref[0] = jnp.maximum(h + r, 0.0).astype(out_ref.dtype)


# ---------------------------------------------------------------------------
# Parameter folding + wrapper
# ---------------------------------------------------------------------------
def _fold_weight(w_pt):
    """PyTorch ConvTranspose1d weight (C_in, C_out, K) -> (C_out, K*C_in) matrix
    with taps flipped, matching the in-kernel im2col row order (k-major, then ci)."""
    cin, cout, k = w_pt.shape
    wf = jnp.transpose(w_pt, (2, 0, 1))[::-1]                 # (K, Cin, Cout), flipped
    return wf.reshape(k * cin, cout).T.astype(jnp.float32)    # (Cout, K*Cin)


def _fold_bn(bn, eps=1e-5):
    """Eval-mode BatchNorm1d folded into per-channel scale/bias, shaped (C, 1)."""
    scale = bn['gamma'] / jnp.sqrt(bn['var'] + eps)
    bias = bn['beta'] - bn['mean'] * scale
    return (scale.reshape(-1, 1).astype(jnp.float32),
            bias.reshape(-1, 1).astype(jnp.float32))


def residual_block_transposed(x, params, *, stride, kernel_sizes=(7, 11, 7)):
    """Eval-mode forward of ResidualBlockTransposed.

    x: (B, C_in, L) float32 (PyTorch NCW).  Returns (B, C_out, L_out) with
    L_out = L*stride for stride>1 (ConvTranspose upsampling) else L.
    """
    assert len(kernel_sizes) == 3
    B, Cin, L = x.shape
    Cout = params['conv1']['w'].shape[1]
    L_out = L * stride if stride > 1 else L
    has_ds = 'downsample' in params

    w1 = _fold_weight(params['conv1']['w']); s1, b1 = _fold_bn(params['conv1']['bn'])
    w2 = _fold_weight(params['conv2']['w']); s2, b2 = _fold_bn(params['conv2']['bn'])
    w3 = _fold_weight(params['conv3']['w']); s3, b3 = _fold_bn(params['conv3']['bn'])

    operands = [x.astype(jnp.float32), w1, s1, b1, w2, s2, b2, w3, s3, b3]

    def _shared(a):     # small weight/BN tensor, same block for every grid step
        return pl.BlockSpec(a.shape, lambda b: (0,) * a.ndim)

    in_specs = [pl.BlockSpec((1, Cin, L), lambda b: (b, 0, 0))]
    in_specs += [_shared(a) for a in operands[1:]]

    if has_ds:
        wd = _fold_weight(params['downsample']['w'])
        sd, bd = _fold_bn(params['downsample']['bn'])
        operands += [wd, sd, bd]
        in_specs += [_shared(wd), _shared(sd), _shared(bd)]

    kernel = functools.partial(
        _residual_block_t_kernel,
        ks=tuple(kernel_sizes), stride=stride, has_downsample=has_ds)

    return pl.pallas_call(
        kernel,
        out_shape=jax.ShapeDtypeStruct((B, Cout, L_out), jnp.float32),
        grid=(B,),
        in_specs=in_specs,
        out_specs=pl.BlockSpec((1, Cout, L_out), lambda b: (b, 0, 0)),
        compiler_params=pltpu.CompilerParams(
            dimension_semantics=("parallel",),          # batch shards across TCs (v7x)
            vmem_limit_bytes=32 * 1024 * 1024),
    )(*operands)


# ---------------------------------------------------------------------------
# Pure-JAX (XLA) reference for validation
# ---------------------------------------------------------------------------
def _conv_transpose_ref(x, w_pt, stride, padding, output_padding):
    K = w_pt.shape[2]
    rhs = jnp.transpose(jnp.flip(w_pt, axis=2), (1, 0, 2))    # (Cout, Cin, K)
    return lax.conv_general_dilated(
        x, rhs, window_strides=(1,),
        padding=[(K - 1 - padding, K - 1 - padding + output_padding)],
        lhs_dilation=(stride,), rhs_dilation=(1,),
        dimension_numbers=('NCH', 'OIH', 'NCH'),
        precision=lax.Precision.HIGHEST)


def _bn_ref(y, bn, eps=1e-5):
    scale = bn['gamma'] / jnp.sqrt(bn['var'] + eps)
    bias = bn['beta'] - bn['mean'] * scale
    return y * scale[None, :, None] + bias[None, :, None]


def reference_forward(x, params, *, stride, kernel_sizes=(7, 11, 7)):
    k1, k2, k3 = kernel_sizes
    op = stride - 1 if stride > 1 else 0
    h = jax.nn.relu(_bn_ref(_conv_transpose_ref(x, params['conv1']['w'], 1, k1 // 2, 0),
                            params['conv1']['bn']))
    h = jax.nn.relu(_bn_ref(_conv_transpose_ref(h, params['conv2']['w'], stride, k2 // 2, op),
                            params['conv2']['bn']))
    h = _bn_ref(_conv_transpose_ref(h, params['conv3']['w'], 1, k3 // 2, 0),
                params['conv3']['bn'])
    if 'downsample' in params:
        r = _bn_ref(_conv_transpose_ref(x, params['downsample']['w'], stride, 0, op),
                    params['downsample']['bn'])
    else:
        r = x
    return jax.nn.relu(h + r)


# ---------------------------------------------------------------------------
# Parameter init (matches the PyTorch module's structure, eval-mode BN stats)
# ---------------------------------------------------------------------------
def init_params(key, cin, cout, *, stride, kernel_sizes=(7, 11, 7)):
    def conv_bn(k, ksize, ci, co):
        kw, kg, kb, km, kv = jax.random.split(k, 5)
        w = jax.random.normal(kw, (ci, co, ksize), jnp.float32) * (ci * ksize) ** -0.5
        bn = dict(gamma=1.0 + 0.1 * jax.random.normal(kg, (co,), jnp.float32),
                  beta=0.1 * jax.random.normal(kb, (co,), jnp.float32),
                  mean=0.1 * jax.random.normal(km, (co,), jnp.float32),
                  var=0.9 + 0.2 * jnp.abs(jax.random.normal(kv, (co,), jnp.float32)))
        return dict(w=w, bn=bn)

    keys = jax.random.split(key, 4)
    p = dict(conv1=conv_bn(keys[0], kernel_sizes[0], cin, cout),
             conv2=conv_bn(keys[1], kernel_sizes[1], cout, cout),
             conv3=conv_bn(keys[2], kernel_sizes[2], cout, cout))
    if stride != 1 or cin != cout:
        p['downsample'] = conv_bn(keys[3], 1, cin, cout)
    return p


# ---------------------------------------------------------------------------
if __name__ == "__main__":
    root = jax.random.PRNGKey(0)
    kx1, kx2, kp1, kp2 = jax.random.split(root, 4)

    # Case 1: stride=2, C_in != C_out -> learned downsample branch, L -> 2L upsampling.
    B, Cin, Cout, L = 2, 4, 8, 16
    x = jax.random.normal(kx1, (B, Cin, L), jnp.float32)        # PyTorch NCW input
    p = init_params(kp1, Cin, Cout, stride=2)
    out = jax.block_until_ready(residual_block_transposed(x, p, stride=2))
    ref = reference_forward(x, p, stride=2)
    assert out.shape == (B, Cout, 2 * L), out.shape
    assert bool(jnp.all(jnp.isfinite(out)))
    assert bool(jnp.allclose(out, ref, atol=2e-2, rtol=2e-2)), \
        float(jnp.max(jnp.abs(out - ref)))

    # Case 2: stride=1, C_in == C_out -> identity residual branch.
    x1 = jax.random.normal(kx2, (B, Cout, L), jnp.float32)
    p1 = init_params(kp2, Cout, Cout, stride=1)
    out1 = jax.block_until_ready(residual_block_transposed(x1, p1, stride=1))
    ref1 = reference_forward(x1, p1, stride=1)
    assert out1.shape == (B, Cout, L), out1.shape
    assert bool(jnp.all(jnp.isfinite(out1)))
    assert bool(jnp.allclose(out1, ref1, atol=2e-2, rtol=2e-2)), \
        float(jnp.max(jnp.abs(out1 - ref1)))

    print("KERNEL_OK")
</pallas_src>

<mosaic_0001>
module attributes {stable_mosaic.version = 11 : i64} {
  func.func @_residual_block_t_kernel(%arg0: i32, %arg1: memref<1x4x16xf32, #tpu.memory_space<vmem>>, %arg2: memref<8x28xf32, #tpu.memory_space<vmem>>, %arg3: memref<8x1xf32, #tpu.memory_space<vmem>>, %arg4: memref<8x1xf32, #tpu.memory_space<vmem>>, %arg5: memref<8x88xf32, #tpu.memory_space<vmem>>, %arg6: memref<8x1xf32, #tpu.memory_space<vmem>>, %arg7: memref<8x1xf32, #tpu.memory_space<vmem>>, %arg8: memref<8x56xf32, #tpu.memory_space<vmem>>, %arg9: memref<8x1xf32, #tpu.memory_space<vmem>>, %arg10: memref<8x1xf32, #tpu.memory_space<vmem>>, %arg11: memref<8x4xf32, #tpu.memory_space<vmem>>, %arg12: memref<8x1xf32, #tpu.memory_space<vmem>>, %arg13: memref<8x1xf32, #tpu.memory_space<vmem>>, %arg14: memref<1x8x32xf32, #tpu.memory_space<vmem>>) attributes {dimension_semantics = [#tpu.dimension_semantics<parallel>], iteration_bounds = array<i64: 2>, scalar_prefetch = 0 : i64, scratch_operands = 0 : i64, tpu.core_type = #tpu.core_type<tc>, window_params = [{transform_indices = @transform_0, window_bounds = array<i64: 1, 4, 16>}, {pipeline_mode = #tpu.pipeline_mode<synchronous>, transform_indices = @transform_1, window_bounds = array<i64: 8, 28>}, {pipeline_mode = #tpu.pipeline_mode<synchronous>, transform_indices = @transform_2, window_bounds = array<i64: 8, 1>}, {pipeline_mode = #tpu.pipeline_mode<synchronous>, transform_indices = @transform_3, window_bounds = array<i64: 8, 1>}, {pipeline_mode = #tpu.pipeline_mode<synchronous>, transform_indices = @transform_4, window_bounds = array<i64: 8, 88>}, {pipeline_mode = #tpu.pipeline_mode<synchronous>, transform_indices = @transform_5, window_bounds = array<i64: 8, 1>}, {pipeline_mode = #tpu.pipeline_mode<synchronous>, transform_indices = @transform_6, window_bounds = array<i64: 8, 1>}, {pipeline_mode = #tpu.pipeline_mode<synchronous>, transform_indices = @transform_7, window_bounds = array<i64: 8, 56>}, {pipeline_mode = #tpu.pipeline_mode<synchronous>, transform_indices = @transform_8, window_bounds = array<i64: 8, 1>}, {pipeline_mode = #tpu.pipeline_mode<synchronous>, transform_indices = @transform_9, window_bounds = array<i64: 8, 1>}, {pipeline_mode = #tpu.pipeline_mode<synchronous>, transform_indices = @transform_10, window_bounds = array<i64: 8, 4>}, {pipeline_mode = #tpu.pipeline_mode<synchronous>, transform_indices = @transform_11, window_bounds = array<i64: 8, 1>}, {pipeline_mode = #tpu.pipeline_mode<synchronous>, transform_indices = @transform_12, window_bounds = array<i64: 8, 1>}, {transform_indices = @transform_13, window_bounds = array<i64: 1, 8, 32>}]} {
    %c0 = arith.constant 0 : index
    %c0_0 = arith.constant 0 : index
    %c0_1 = arith.constant 0 : index
    %0 = vector.load %arg1[%c0, %c0_0, %c0_1] : memref<1x4x16xf32, #tpu.memory_space<vmem>>, vector<1x4x16xf32>
    %1 = vector.shape_cast %0 : vector<1x4x16xf32> to vector<4x16xf32>
    %c0_2 = arith.constant 0 : index
    %c0_3 = arith.constant 0 : index
    %2 = vector.load %arg2[%c0_2, %c0_3] : memref<8x28xf32, #tpu.memory_space<vmem>>, vector<8x28xf32>
    %cst = arith.constant 0.000000e+00 : f32
    %3 = vector.broadcast %cst : f32 to vector<4x3xf32>
    %cst_4 = arith.constant 0.000000e+00 : f32
    %4 = vector.broadcast %cst_4 : f32 to vector<4x3xf32>
    %5 = tpu.concatenate %3, %1, %4 in 1 : vector<4x3xf32>, vector<4x16xf32>, vector<4x3xf32> -> vector<4x22xf32>
    %6 = vector.extract_strided_slice %5 {offsets = [0, 0], sizes = [4, 16], strides = [1, 1]} : vector<4x22xf32> to vector<4x16xf32>
    %7 = vector.extract_strided_slice %5 {offsets = [0, 1], sizes = [4, 16], strides = [1, 1]} : vector<4x22xf32> to vector<4x16xf32>
    %8 = vector.extract_strided_slice %5 {offsets = [0, 2], sizes = [4, 16], strides = [1, 1]} : vector<4x22xf32> to vector<4x16xf32>
    %9 = vector.extract_strided_slice %5 {offsets = [0, 3], sizes = [4, 16], strides = [1, 1]} : vector<4x22xf32> to vector<4x16xf32>
    %10 = vector.extract_strided_slice %5 {offsets = [0, 4], sizes = [4, 16], strides = [1, 1]} : vector<4x22xf32> to vector<4x16xf32>
    %11 = vector.extract_strided_slice %5 {offsets = [0, 5], sizes = [4, 16], strides = [1, 1]} : vector<4x22xf32> to vector<4x16xf32>
    %12 = vector.extract_strided_slice %5 {offsets = [0, 6], sizes = [4, 16], strides = [1, 1]} : vector<4x22xf32> to vector<4x16xf32>
    %13 = tpu.concatenate %6, %7, %8, %9, %10, %11, %12 in 0 : vector<4x16xf32>, vector<4x16xf32>, vector<4x16xf32>, vector<4x16xf32>, vector<4x16xf32>, vector<4x16xf32>, vector<4x16xf32> -> vector<28x16xf32>
    %cst_5 = arith.constant dense<0.000000e+00> : vector<8x16xf32>
    %14 = tpu.matmul %2, %13, %cst_5 {dimension_numbers = #tpu.dot_dimension_numbers<[1], [0], [0], [1], [0, 0, 1, 1], [], []>} : vector<8x28xf32>, vector<28x16xf32>, vector<8x16xf32> -> vector<8x16xf32>
    %c0_6 = arith.constant 0 : index
    %c0_7 = arith.constant 0 : index
    %15 = vector.load %arg3[%c0_6, %c0_7] : memref<8x1xf32, #tpu.memory_space<vmem>>, vector<8x1xf32>
    %16 = vector.broadcast %15 : vector<8x1xf32> to vector<8x16xf32>
    %17 = arith.mulf %14, %16 : vector<8x16xf32>
    %c0_8 = arith.constant 0 : index
    %c0_9 = arith.constant 0 : index
    %18 = vector.load %arg4[%c0_8, %c0_9] : memref<8x1xf32, #tpu.memory_space<vmem>>, vector<8x1xf32>
    %19 = vector.broadcast %18 : vector<8x1xf32> to vector<8x16xf32>
    %20 = arith.addf %17, %19 : vector<8x16xf32>
    %cst_10 = arith.constant 0.000000e+00 : f32
    %21 = vector.broadcast %cst_10 : f32 to vector<8x16xf32>
    %22 = arith.maximumf %20, %21 : vector<8x16xf32>
    %c0_11 = arith.constant 0 : index
    %c0_12 = arith.constant 0 : index
    %23 = vector.load %arg5[%c0_11, %c0_12] : memref<8x88xf32, #tpu.memory_space<vmem>>, vector<8x88xf32>
    %24 = tpu.iota {dimensions = array<i32: 0>} : vector<16x42xi32>
    %25 = tpu.iota {dimensions = array<i32: 1>} : vector<16x42xi32>
    %c2_i32 = arith.constant 2 : i32
    %26 = vector.broadcast %c2_i32 : i32 to vector<16x42xi32>
    %27 = arith.muli %26, %24 : vector<16x42xi32>
    %c5_i32 = arith.constant 5 : i32
    %28 = vector.broadcast %c5_i32 : i32 to vector<16x42xi32>
    %29 = arith.addi %27, %28 : vector<16x42xi32>
    %30 = arith.cmpi eq, %25, %29 : vector<16x42xi32>
    %31 = arith.extui %30 : vector<16x42xi1> to vector<16x42xi32>
    %32 = arith.sitofp %31 : vector<16x42xi32> to vector<16x42xf32>
    %cst_13 = arith.constant dense<0.000000e+00> : vector<8x42xf32>
    %33 = tpu.matmul %22, %32, %cst_13 {dimension_numbers = #tpu.dot_dimension_numbers<[1], [0], [0], [1], [0, 0, 1, 1], [], []>} : vector<8x16xf32>, vector<16x42xf32>, vector<8x42xf32> -> vector<8x42xf32>
    %34 = vector.extract_strided_slice %33 {offsets = [0, 0], sizes = [8, 32], strides = [1, 1]} : vector<8x42xf32> to vector<8x32xf32>
    %35 = vector.extract_strided_slice %33 {offsets = [0, 1], sizes = [8, 32], strides = [1, 1]} : vector<8x42xf32> to vector<8x32xf32>
    %36 = vector.extract_strided_slice %33 {offsets = [0, 2], sizes = [8, 32], strides = [1, 1]} : vector<8x42xf32> to vector<8x32xf32>
    %37 = vector.extract_strided_slice %33 {offsets = [0, 3], sizes = [8, 32], strides = [1, 1]} : vector<8x42xf32> to vector<8x32xf32>
    %38 = vector.extract_strided_slice %33 {offsets = [0, 4], sizes = [8, 32], strides = [1, 1]} : vector<8x42xf32> to vector<8x32xf32>
    %39 = vector.extract_strided_slice %33 {offsets = [0, 5], sizes = [8, 32], strides = [1, 1]} : vector<8x42xf32> to vector<8x32xf32>
    %40 = vector.extract_strided_slice %33 {offsets = [0, 6], sizes = [8, 32], strides = [1, 1]} : vector<8x42xf32> to vector<8x32xf32>
    %41 = vector.extract_strided_slice %33 {offsets = [0, 7], sizes = [8, 32], strides = [1, 1]} : vector<8x42xf32> to vector<8x32xf32>
    %42 = vector.extract_strided_slice %33 {offsets = [0, 8], sizes = [8, 32], strides = [1, 1]} : vector<8x42xf32> to vector<8x32xf32>
    %43 = vector.extract_strided_slice %33 {offsets = [0, 9], sizes = [8, 32], strides = [1, 1]} : vector<8x42xf32> to vector<8x32xf32>
    %44 = vector.extract_strided_slice %33 {offsets = [0, 10], sizes = [8, 32], strides = [1, 1]} : vector<8x42xf32> to vector<8x32xf32>
    %45 = tpu.concatenate %34, %35, %36, %37, %38, %39, %40, %41, %42, %43, %44 in 0 : vector<8x32xf32>, vector<8x32xf32>, vector<8x32xf32>, vector<8x32xf32>, vector<8x32xf32>, vector<8x32xf32>, vector<8x32xf32>, vector<8x32xf32>, vector<8x32xf32>, vector<8x32xf32>, vector<8x32xf32> -> vector<88x32xf32>
    %cst_14 = arith.constant dense<0.000000e+00> : vector<8x32xf32>
    %46 = tpu.matmul %23, %45, %cst_14 {dimension_numbers = #tpu.dot_dimension_numbers<[1], [0], [0], [1], [0, 0, 1, 1], [], []>} : vector<8x88xf32>, vector<88x32xf32>, vector<8x32xf32> -> vector<8x32xf32>
    %c0_15 = arith.constant 0 : index
    %c0_16 = arith.constant 0 : index
    %47 = vector.load %arg6[%c0_15, %c0_16] : memref<8x1xf32, #tpu.memory_space<vmem>>, vector<8x1xf32>
    %48 = vector.broadcast %47 : vector<8x1xf32> to vector<8x32xf32>
    %49 = arith.mulf %46, %48 : vector<8x32xf32>
    %c0_17 = arith.constant 0 : index
    %c0_18 = arith.constant 0 : index
    %50 = vector.load %arg7[%c0_17, %c0_18] : memref<8x1xf32, #tpu.memory_space<vmem>>, vector<8x1xf32>
    %51 = vector.broadcast %50 : vector<8x1xf32> to vector<8x32xf32>
    %52 = arith.addf %49, %51 : vector<8x32xf32>
    %cst_19 = arith.constant 0.000000e+00 : f32
    %53 = vector.broadcast %cst_19 : f32 to vector<8x32xf32>
    %54 = arith.maximumf %52, %53 : vector<8x32xf32>
    %c0_20 = arith.constant 0 : index
    %c0_21 = arith.constant 0 : index
    %55 = vector.load %arg8[%c0_20, %c0_21] : memref<8x56xf32, #tpu.memory_space<vmem>>, vector<8x56xf32>
    %cst_22 = arith.constant 0.000000e+00 : f32
    %56 = vector.broadcast %cst_22 : f32 to vector<8x3xf32>
    %cst_23 = arith.constant 0.000000e+00 : f32
    %57 = vector.broadcast %cst_23 : f32 to vector<8x3xf32>
    %58 = tpu.concatenate %56, %54, %57 in 1 : vector<8x3xf32>, vector<8x32xf32>, vector<8x3xf32> -> vector<8x38xf32>
    %59 = vector.extract_strided_slice %58 {offsets = [0, 0], sizes = [8, 32], strides = [1, 1]} : vector<8x38xf32> to vector<8x32xf32>
    %60 = vector.extract_strided_slice %58 {offsets = [0, 1], sizes = [8, 32], strides = [1, 1]} : vector<8x38xf32> to vector<8x32xf32>
    %61 = vector.extract_strided_slice %58 {offsets = [0, 2], sizes = [8, 32], strides = [1, 1]} : vector<8x38xf32> to vector<8x32xf32>
    %62 = vector.extract_strided_slice %58 {offsets = [0, 3], sizes = [8, 32], strides = [1, 1]} : vector<8x38xf32> to vector<8x32xf32>
    %63 = vector.extract_strided_slice %58 {offsets = [0, 4], sizes = [8, 32], strides = [1, 1]} : vector<8x38xf32> to vector<8x32xf32>
    %64 = vector.extract_strided_slice %58 {offsets = [0, 5], sizes = [8, 32], strides = [1, 1]} : vector<8x38xf32> to vector<8x32xf32>
    %65 = vector.extract_strided_slice %58 {offsets = [0, 6], sizes = [8, 32], strides = [1, 1]} : vector<8x38xf32> to vector<8x32xf32>
    %66 = tpu.concatenate %59, %60, %61, %62, %63, %64, %65 in 0 : vector<8x32xf32>, vector<8x32xf32>, vector<8x32xf32>, vector<8x32xf32>, vector<8x32xf32>, vector<8x32xf32>, vector<8x32xf32> -> vector<56x32xf32>
    %cst_24 = arith.constant dense<0.000000e+00> : vector<8x32xf32>
    %67 = tpu.matmul %55, %66, %cst_24 {dimension_numbers = #tpu.dot_dimension_numbers<[1], [0], [0], [1], [0, 0, 1, 1], [], []>} : vector<8x56xf32>, vector<56x32xf32>, vector<8x32xf32> -> vector<8x32xf32>
    %c0_25 = arith.constant 0 : index
    %c0_26 = arith.constant 0 : index
    %68 = vector.load %arg9[%c0_25, %c0_26] : memref<8x1xf32, #tpu.memory_space<vmem>>, vector<8x1xf32>
    %69 = vector.broadcast %68 : vector<8x1xf32> to vector<8x32xf32>
    %70 = arith.mulf %67, %69 : vector<8x32xf32>
    %c0_27 = arith.constant 0 : index
    %c0_28 = arith.constant 0 : index
    %71 = vector.load %arg10[%c0_27, %c0_28] : memref<8x1xf32, #tpu.memory_space<vmem>>, vector<8x1xf32>
    %72 = vector.broadcast %71 : vector<8x1xf32> to vector<8x32xf32>
    %73 = arith.addf %70, %72 : vector<8x32xf32>
    %c0_29 = arith.constant 0 : index
    %c0_30 = arith.constant 0 : index
    %74 = vector.load %arg11[%c0_29, %c0_30] : memref<8x4xf32, #tpu.memory_space<vmem>>, vector<8x4xf32>
    %75 = tpu.iota {dimensions = array<i32: 0>} : vector<16x32xi32>
    %76 = tpu.iota {dimensions = array<i32: 1>} : vector<16x32xi32>
    %c2_i32_31 = arith.constant 2 : i32
    %77 = vector.broadcast %c2_i32_31 : i32 to vector<16x32xi32>
    %78 = arith.muli %77, %75 : vector<16x32xi32>
    %c0_i32 = arith.constant 0 : i32
    %79 = vector.broadcast %c0_i32 : i32 to vector<16x32xi32>
    %80 = arith.addi %78, %79 : vector<16x32xi32>
    %81 = arith.cmpi eq, %76, %80 : vector<16x32xi32>
    %82 = arith.extui %81 : vector<16x32xi1> to vector<16x32xi32>
    %83 = arith.sitofp %82 : vector<16x32xi32> to vector<16x32xf32>
    %cst_32 = arith.constant dense<0.000000e+00> : vector<4x32xf32>
    %84 = tpu.matmul %1, %83, %cst_32 {dimension_numbers = #tpu.dot_dimension_numbers<[1], [0], [0], [1], [0, 0, 1, 1], [], []>} : vector<4x16xf32>, vector<16x32xf32>, vector<4x32xf32> -> vector<4x32xf32>
    %cst_33 = arith.constant dense<0.000000e+00> : vector<8x32xf32>
    %85 = tpu.matmul %74, %84, %cst_33 {dimension_numbers = #tpu.dot_dimension_numbers<[1], [0], [0], [1], [0, 0, 1, 1], [], []>} : vector<8x4xf32>, vector<4x32xf32>, vector<8x32xf32> -> vector<8x32xf32>
    %c0_34 = arith.constant 0 : index
    %c0_35 = arith.constant 0 : index
    %86 = vector.load %arg12[%c0_34, %c0_35] : memref<8x1xf32, #tpu.memory_space<vmem>>, vector<8x1xf32>
    %87 = vector.broadcast %86 : vector<8x1xf32> to vector<8x32xf32>
    %88 = arith.mulf %85, %87 : vector<8x32xf32>
    %c0_36 = arith.constant 0 : index
    %c0_37 = arith.constant 0 : index
    %89 = vector.load %arg13[%c0_36, %c0_37] : memref<8x1xf32, #tpu.memory_space<vmem>>, vector<8x1xf32>
    %90 = vector.broadcast %89 : vector<8x1xf32> to vector<8x32xf32>
    %91 = arith.addf %88, %90 : vector<8x32xf32>
    %92 = arith.addf %73, %91 : vector<8x32xf32>
    %cst_38 = arith.constant 0.000000e+00 : f32
    %93 = vector.broadcast %cst_38 : f32 to vector<8x32xf32>
    %94 = arith.maximumf %92, %93 : vector<8x32xf32>
    %c0_39 = arith.constant 0 : index
    %c0_40 = arith.constant 0 : index
    %c0_41 = arith.constant 0 : index
    %95 = vector.load %arg14[%c0_39, %c0_40, %c0_41] : memref<1x8x32xf32, #tpu.memory_space<vmem>>, vector<1x8x32xf32>
    %96 = vector.shape_cast %95 : vector<1x8x32xf32> to vector<8x32xf32>
    %97 = vector.shape_cast %94 : vector<8x32xf32> to vector<1x8x32xf32>
    tpu.vector_store %arg14[%c0_39, %c0_40, %c0_41], %97 {strides = array<i32>} : memref<1x8x32xf32, #tpu.memory_space<vmem>>, vector<1x8x32xf32>,
    return
  }
  func.func @transform_0(%arg0: i32) -> (i32, i32, i32) {
    %c0_i32 = arith.constant 0 : i32
    %c0_i32_0 = arith.constant 0 : i32
    %c0_i32_1 = arith.constant 0 : i32
    return %arg0, %c0_i32, %c0_i32_0 : i32, i32, i32
  }
  func.func @transform_1(%arg0: i32) -> (i32, i32) {
    %c0_i32 = arith.constant 0 : i32
    %c0_i32_0 = arith.constant 0 : i32
    %c0_i32_1 = arith.constant 0 : i32
    return %c0_i32, %c0_i32_0 : i32, i32
  }
  func.func @transform_2(%arg0: i32) -> (i32, i32) {
    %c0_i32 = arith.constant 0 : i32
    %c0_i32_0 = arith.constant 0 : i32
    %c0_i32_1 = arith.constant 0 : i32
    return %c0_i32, %c0_i32_0 : i32, i32
  }
  func.func @transform_3(%arg0: i32) -> (i32, i32) {
    %c0_i32 = arith.constant 0 : i32
    %c0_i32_0 = arith.constant 0 : i32
    %c0_i32_1 = arith.constant 0 : i32
    return %c0_i32, %c0_i32_0 : i32, i32
  }
  func.func @transform_4(%arg0: i32) -> (i32, i32) {
    %c0_i32 = arith.constant 0 : i32
    %c0_i32_0 = arith.constant 0 : i32
    %c0_i32_1 = arith.constant 0 : i32
    return %c0_i32, %c0_i32_0 : i32, i32
  }
  func.func @transform_5(%arg0: i32) -> (i32, i32) {
    %c0_i32 = arith.constant 0 : i32
    %c0_i32_0 = arith.constant 0 : i32
    %c0_i32_1 = arith.constant 0 : i32
    return %c0_i32, %c0_i32_0 : i32, i32
  }
  func.func @transform_6(%arg0: i32) -> (i32, i32) {
    %c0_i32 = arith.constant 0 : i32
    %c0_i32_0 = arith.constant 0 : i32
    %c0_i32_1 = arith.constant 0 : i32
    return %c0_i32, %c0_i32_0 : i32, i32
  }
  func.func @transform_7(%arg0: i32) -> (i32, i32) {
    %c0_i32 = arith.constant 0 : i32
    %c0_i32_0 = arith.constant 0 : i32
    %c0_i32_1 = arith.constant 0 : i32
    return %c0_i32, %c0_i32_0 : i32, i32
  }
  func.func @transform_8(%arg0: i32) -> (i32, i32) {
    %c0_i32 = arith.constant 0 : i32
    %c0_i32_0 = arith.constant 0 : i32
    %c0_i32_1 = arith.constant 0 : i32
    return %c0_i32, %c0_i32_0 : i32, i32
  }
  func.func @transform_9(%arg0: i32) -> (i32, i32) {
    %c0_i32 = arith.constant 0 : i32
    %c0_i32_0 = arith.constant 0 : i32
    %c0_i32_1 = arith.constant 0 : i32
    return %c0_i32, %c0_i32_0 : i32, i32
  }
  func.func @transform_10(%arg0: i32) -> (i32, i32) {
    %c0_i32 = arith.constant 0 : i32
    %c0_i32_0 = arith.constant 0 : i32
    %c0_i32_1 = arith.constant 0 : i32
    return %c0_i32, %c0_i32_0 : i32, i32
  }
  func.func @transform_11(%arg0: i32) -> (i32, i32) {
    %c0_i32 = arith.constant 0 : i32
    %c0_i32_0 = arith.constant 0 : i32
    %c0_i32_1 = arith.constant 0 : i32
    return %c0_i32, %c0_i32_0 : i32, i32
  }
  func.func @transform_12(%arg0: i32) -> (i32, i32) {
    %c0_i32 = arith.constant 0 : i32
    %c0_i32_0 = arith.constant 0 : i32
    %c0_i32_1 = arith.constant 0 : i32
    return %c0_i32, %c0_i32_0 : i32, i32
  }
  func.func @transform_13(%arg0: i32) -> (i32, i32, i32) {
    %c0_i32 = arith.constant 0 : i32
    %c0_i32_0 = arith.constant 0 : i32
    %c0_i32_1 = arith.constant 0 : i32
    return %arg0, %c0_i32, %c0_i32_0 : i32, i32, i32
  }
}

</mosaic_0001>

<llo_original>
// kernel: tpu_custom_call.1
$region0: #{tpu_custom_call.1}
  #allocation0 [shape = 'u32[]', space=smem, size = 0x4, offset = 0x4, fixed_abs, tag = 'smem constant byte address 0x4 - core index']
  #allocation1 [shape = 'u32[144,128]{1,0:T(1,128)}', space=vmem, size = 0x12000, scoped, tag = 'internal scratch']
  %s0 = inlined_call_operand.vmem [shape: f32[2,4,16], index: 0, kind: input, shape index: {}]
  %s1 = inlined_call_operand.vmem [shape: f32[8,28], index: 1, kind: input, shape index: {}]
  %s2 = inlined_call_operand.vmem [shape: f32[8,1], index: 2, kind: input, shape index: {}]
  %s3 = inlined_call_operand.vmem [shape: f32[8,1], index: 3, kind: input, shape index: {}]
  %s4 = inlined_call_operand.vmem [shape: f32[8,88], index: 4, kind: input, shape index: {}]
  %s5 = inlined_call_operand.vmem [shape: f32[8,1], index: 5, kind: input, shape index: {}]
  %s6 = inlined_call_operand.vmem [shape: f32[8,1], index: 6, kind: input, shape index: {}]
  %s7 = inlined_call_operand.vmem [shape: f32[8,56], index: 7, kind: input, shape index: {}]
  %s8 = inlined_call_operand.vmem [shape: f32[8,1], index: 8, kind: input, shape index: {}]
  %s9 = inlined_call_operand.vmem [shape: f32[8,1], index: 9, kind: input, shape index: {}]
  %s10 = inlined_call_operand.vmem [shape: f32[8,4], index: 10, kind: input, shape index: {}]
  %s11 = inlined_call_operand.vmem [shape: f32[8,1], index: 11, kind: input, shape index: {}]
  %s12 = inlined_call_operand.vmem [shape: f32[8,1], index: 12, kind: input, shape index: {}]
  %s13 = inlined_call_operand.hbm [shape: f32[2,8,32], index: 13, kind: output, shape index: {}]
  %s14 = sld [smem:[#allocation0]]
  $region85: #{tpu_custom_call.1} parent=0
    _
  %s16 = ssub.s32 1, %s14
  %s17 = scalar_select 0, %s16, %s14
  $region1: #{tpu_custom_call.1} parent=0
    #allocation2 [shape = 'u8[8192]{0}', space=vmem, size = 0x2000, scoped, tag = 'output window, operand 0']
    #allocation3 [shape = 's32[2]{0}', space=sflag, size = 0x8, scoped, tag = 'scoped memory for tpu_custom_call.1']
    %18 = vsyncpa [#allocation3], 0
    %s19 = scalar_lea.sflag [#allocation3], 1
    %20 = vsyncpa %s19, 0
    loop: start=0, step=1, limit=4
    $region2: #{tpu_custom_call.1} parent=1 // loop_pre_header
      _
    $region3: #{tpu_custom_call.1} parent=1 // loop_header
      %s22 = sphi 0, %s26
      %p23 = scmp.ge.s32.totalorder %s22, 4
      %s32 = sphi 0, %s34
      %s35 = sphi 0, %s32
      %s36 = sphi 0, %s35
      %s52 = sphi 0, %s36
      %s56 = sphi 0, %s56
      %s58 = sphi 0, %s56
      %s59 = sphi 0, %s58
      %s73 = sphi 0, %s59
      %s77 = sphi 0, %s77
      %s79 = sphi 0, %s77
      %s80 = sphi 0, %s79
      %s94 = sphi 0, %s80
      %s98 = sphi 0, %s98
      %s100 = sphi 0, %s98
      %s101 = sphi 0, %s100
      %s115 = sphi 0, %s101
      %s119 = sphi 0, %s119
      %s121 = sphi 0, %s119
      %s122 = sphi 0, %s121
      %s136 = sphi 0, %s122
      %s140 = sphi 0, %s140
      %s142 = sphi 0, %s140
      %s143 = sphi 0, %s142
      %s157 = sphi 0, %s143
      %s161 = sphi 0, %s161
      %s163 = sphi 0, %s161
      %s164 = sphi 0, %s163
      %s178 = sphi 0, %s164
      %s182 = sphi 0, %s182
      %s184 = sphi 0, %s182
      %s185 = sphi 0, %s184
      %s199 = sphi 0, %s185
      %s203 = sphi 0, %s203
      %s205 = sphi 0, %s203
      %s206 = sphi 0, %s205
      %s220 = sphi 0, %s206
      %s224 = sphi 0, %s224
      %s226 = sphi 0, %s224
      %s227 = sphi 0, %s226
      %s241 = sphi 0, %s227
      %s245 = sphi 0, %s245
      %s247 = sphi 0, %s245
      %s248 = sphi 0, %s247
      %s262 = sphi 0, %s248
      %s266 = sphi 0, %s266
      %s268 = sphi 0, %s266
      %s269 = sphi 0, %s268
      %s283 = sphi 0, %s269
      %s287 = sphi 0, %s287
      %s289 = sphi 0, %s287
      %s290 = sphi 0, %s289
      %s304 = sphi 0, %s290
      %s310 = sphi 0, %s312
      %s313 = sphi 0, %s310
      %s314 = sphi 0, %s313
      %s330 = sphi 0, %s314
    $region4: #{tpu_custom_call.1} parent=1 // loop_header_branch
      %25 = sbr.rel (%p23) target = $region8
    $region5: #{tpu_custom_call.1} parent=1 // loop_body
      %s27 = ssub.s32 %s22, 1
      %s28 = ssub.s32 %s22, 2
      %s29 = sadd.s32 %s22, 1
      %s30 = ssub.s32 %s22, %s29
      %p31 = scmp.eq.s32.totalorder %s30, 0
      %s33 = sadd.s32 %s32, 1
      %s34 = scalar_select %p31, %s32, %s33
      %p37 = pneg %p31
      %p38 = scmp.eq.s32.totalorder %s22, 1
      %p39 = por %p37, %p38
      %p40 = scmp.ne.s32.totalorder %s32, %s35
      %p41 = scmp.eq.s32.totalorder %s22, 0
      %p42 = por %p40, %p41
      %p43 = scmp.ne.s32.totalorder %s32, %s35
      %p44 = scmp.eq.s32.totalorder %s27, 1
      %p45 = por %p43, %p44
      %p46 = scmp.ne.s32.totalorder %s35, %s36
      %p47 = scmp.eq.s32.totalorder %s27, 0
      %p48 = por %p46, %p47
      %p49 = scmp.ne.s32.totalorder %s35, %s36
      %p50 = scmp.eq.s32.totalorder %s28, 1
      %p51 = por %p49, %p50
      %p53 = scmp.ne.s32.totalorder %s36, %s52
      %p54 = scmp.eq.s32.totalorder %s28, 0
      %p55 = por %p53, %p54
      %s57 = sadd.s32 %s56, 1
      %p60 = scmp.eq.s32.totalorder %s22, 1
      %p61 = scmp.ne.s32.totalorder %s56, %s58
      %p62 = scmp.eq.s32.totalorder %s22, 0
      %p63 = por %p61, %p62
      %p64 = scmp.ne.s32.totalorder %s56, %s58
      %p65 = scmp.eq.s32.totalorder %s27, 1
      %p66 = por %p64, %p65
      %p67 = scmp.ne.s32.totalorder %s58, %s59
      %p68 = scmp.eq.s32.totalorder %s27, 0
      %p69 = por %p67, %p68
      %p70 = scmp.ne.s32.totalorder %s58, %s59
      %p71 = scmp.eq.s32.totalorder %s28, 1
      %p72 = por %p70, %p71
      %p74 = scmp.ne.s32.totalorder %s59, %s73
      %p75 = scmp.eq.s32.totalorder %s28, 0
      %p76 = por %p74, %p75
      %s78 = sadd.s32 %s77, 1
      %p81 = scmp.eq.s32.totalorder %s22, 1
      %p82 = scmp.ne.s32.totalorder %s77, %s79
      %p83 = scmp.eq.s32.totalorder %s22, 0
      %p84 = por %p82, %p83
      %p85 = scmp.ne.s32.totalorder %s77, %s79
      %p86 = scmp.eq.s32.totalorder %s27, 1
      %p87 = por %p85, %p86
      %p88 = scmp.ne.s32.totalorder %s79, %s80
      %p89 = scmp.eq.s32.totalorder %s27, 0
      %p90 = por %p88, %p89
      %p91 = scmp.ne.s32.totalorder %s79, %s80
      %p92 = scmp.eq.s32.totalorder %s28, 1
      %p93 = por %p91, %p92
      %p95 = scmp.ne.s32.totalorder %s80, %s94
      %p96 = scmp.eq.s32.totalorder %s28, 0
      %p97 = por %p95, %p96
      %s99 = sadd.s32 %s98, 1
      %p102 = scmp.eq.s32.totalorder %s22, 1
      %p103 = scmp.ne.s32.totalorder %s98, %s100
      %p104 = scmp.eq.s32.totalorder %s22, 0
      %p105 = por %p103, %p104
      %p106 = scmp.ne.s32.totalorder %s98, %s100
      %p107 = scmp.eq.s32.totalorder %s27, 1
      %p108 = por %p106, %p107
      %p109 = scmp.ne.s32.totalorder %s100, %s101
      %p110 = scmp.eq.s32.totalorder %s27, 0
      %p111 = por %p109, %p110
      %p112 = scmp.ne.s32.totalorder %s100, %s101
      %p113 = scmp.eq.s32.totalorder %s28, 1
      %p114 = por %p112, %p113
      %p116 = scmp.ne.s32.totalorder %s101, %s115
      %p117 = scmp.eq.s32.totalorder %s28, 0
      %p118 = por %p116, %p117
      %s120 = sadd.s32 %s119, 1
      %p123 = scmp.eq.s32.totalorder %s22, 1
      %p124 = scmp.ne.s32.totalorder %s119, %s121
      %p125 = scmp.eq.s32.totalorder %s22, 0
      %p126 = por %p124, %p125
      %p127 = scmp.ne.s32.totalorder %s119, %s121
      %p128 = scmp.eq.s32.totalorder %s27, 1
      %p129 = por %p127, %p128
      %p130 = scmp.ne.s32.totalorder %s121, %s122
      %p131 = scmp.eq.s32.totalorder %s27, 0
      %p132 = por %p130, %p131
      %p133 = scmp.ne.s32.totalorder %s121, %s122
      %p134 = scmp.eq.s32.totalorder %s28, 1
      %p135 = por %p133, %p134
      %p137 = scmp.ne.s32.totalorder %s122, %s136
      %p138 = scmp.eq.s32.totalorder %s28, 0
      %p139 = por %p137, %p138
      %s141 = sadd.s32 %s140, 1
      %p144 = scmp.eq.s32.totalorder %s22, 1
      %p145 = scmp.ne.s32.totalorder %s140, %s142
      %p146 = scmp.eq.s32.totalorder %s22, 0
      %p147 = por %p145, %p146
      %p148 = scmp.ne.s32.totalorder %s140, %s142
      %p149 = scmp.eq.s32.totalorder %s27, 1
      %p150 = por %p148, %p149
      %p151 = scmp.ne.s32.totalorder %s142, %s143
      %p152 = scmp.eq.s32.totalorder %s27, 0
      %p153 = por %p151, %p152
      %p154 = scmp.ne.s32.totalorder %s142, %s143
      %p155 = scmp.eq.s32.totalorder %s28, 1
      %p156 = por %p154, %p155
      %p158 = scmp.ne.s32.totalorder %s143, %s157
      %p159 = scmp.eq.s32.totalorder %s28, 0
      %p160 = por %p158, %p159
      %s162 = sadd.s32 %s161, 1
      %p165 = scmp.eq.s32.totalorder %s22, 1
      %p166 = scmp.ne.s32.totalorder %s161, %s163
      %p167 = scmp.eq.s32.totalorder %s22, 0
      %p168 = por %p166, %p167
      %p169 = scmp.ne.s32.totalorder %s161, %s163
      %p170 = scmp.eq.s32.totalorder %s27, 1
      %p171 = por %p169, %p170
      %p172 = scmp.ne.s32.totalorder %s163, %s164
      %p173 = scmp.eq.s32.totalorder %s27, 0
      %p174 = por %p172, %p173
      %p175 = scmp.ne.s32.totalorder %s163, %s164
      %p176 = scmp.eq.s32.totalorder %s28, 1
      %p177 = por %p175, %p176
      %p179 = scmp.ne.s32.totalorder %s164, %s178
      %p180 = scmp.eq.s32.totalorder %s28, 0
      %p181 = por %p179, %p180
      %s183 = sadd.s32 %s182, 1
      %p186 = scmp.eq.s32.totalorder %s22, 1
      %p187 = scmp.ne.s32.totalorder %s182, %s184
      %p188 = scmp.eq.s32.totalorder %s22, 0
      %p189 = por %p187, %p188
      %p190 = scmp.ne.s32.totalorder %s182, %s184
      %p191 = scmp.eq.s32.totalorder %s27, 1
      %p192 = por %p190, %p191
      %p193 = scmp.ne.s32.totalorder %s184, %s185
      %p194 = scmp.eq.s32.totalorder %s27, 0
      %p195 = por %p193, %p194
      %p196 = scmp.ne.s32.totalorder %s184, %s185
      %p197 = scmp.eq.s32.totalorder %s28, 1
      %p198 = por %p196, %p197
      %p200 = scmp.ne.s32.totalorder %s185, %s199
      %p201 = scmp.eq.s32.totalorder %s28, 0
      %p202 = por %p200, %p201
      %s204 = sadd.s32 %s203, 1
      %p207 = scmp.eq.s32.totalorder %s22, 1
      %p208 = scmp.ne.s32.totalorder %s203, %s205
      %p209 = scmp.eq.s32.totalorder %s22, 0
      %p210 = por %p208, %p209
      %p211 = scmp.ne.s32.totalorder %s203, %s205
      %p212 = scmp.eq.s32.totalorder %s27, 1
      %p213 = por %p211, %p212
      %p214 = scmp.ne.s32.totalorder %s205, %s206
      %p215 = scmp.eq.s32.totalorder %s27, 0
      %p216 = por %p214, %p215
      %p217 = scmp.ne.s32.totalorder %s205, %s206
      %p218 = scmp.eq.s32.totalorder %s28, 1
      %p219 = por %p217, %p218
      %p221 = scmp.ne.s32.totalorder %s206, %s220
      %p222 = scmp.eq.s32.totalorder %s28, 0
      %p223 = por %p221, %p222
      %s225 = sadd.s32 %s224, 1
      %p228 = scmp.eq.s32.totalorder %s22, 1
      %p229 = scmp.ne.s32.totalorder %s224, %s226
      %p230 = scmp.eq.s32.totalorder %s22, 0
      %p231 = por %p229, %p230
      %p232 = scmp.ne.s32.totalorder %s224, %s226
      %p233 = scmp.eq.s32.totalorder %s27, 1
      %p234 = por %p232, %p233
      %p235 = scmp.ne.s32.totalorder %s226, %s227
      %p236 = scmp.eq.s32.totalorder %s27, 0
      %p237 = por %p235, %p236
      %p238 = scmp.ne.s32.totalorder %s226, %s227
      %p239 = scmp.eq.s32.totalorder %s28, 1
      %p240 = por %p238, %p239
      %p242 = scmp.ne.s32.totalorder %s227, %s241
      %p243 = scmp.eq.s32.totalorder %s28, 0
      %p244 = por %p242, %p243
      %s246 = sadd.s32 %s245, 1
      %p249 = scmp.eq.s32.totalorder %s22, 1
      %p250 = scmp.ne.s32.totalorder %s245, %s247
      %p251 = scmp.eq.s32.totalorder %s22, 0
      %p252 = por %p250, %p251
      %p253 = scmp.ne.s32.totalorder %s245, %s247
      %p254 = scmp.eq.s32.totalorder %s27, 1
      %p255 = por %p253, %p254
      %p256 = scmp.ne.s32.totalorder %s247, %s248
      %p257 = scmp.eq.s32.totalorder %s27, 0
      %p258 = por %p256, %p257
      %p259 = scmp.ne.s32.totalorder %s247, %s248
      %p260 = scmp.eq.s32.totalorder %s28, 1
      %p261 = por %p259, %p260
      %p263 = scmp.ne.s32.totalorder %s248, %s262
      %p264 = scmp.eq.s32.totalorder %s28, 0
      %p265 = por %p263, %p264
      %s267 = sadd.s32 %s266, 1
      %p270 = scmp.eq.s32.totalorder %s22, 1
      %p271 = scmp.ne.s32.totalorder %s266, %s268
      %p272 = scmp.eq.s32.totalorder %s22, 0
      %p273 = por %p271, %p272
      %p274 = scmp.ne.s32.totalorder %s266, %s268
      %p275 = scmp.eq.s32.totalorder %s27, 1
      %p276 = por %p274, %p275
      %p277 = scmp.ne.s32.totalorder %s268, %s269
      %p278 = scmp.eq.s32.totalorder %s27, 0
      %p279 = por %p277, %p278
      %p280 = scmp.ne.s32.totalorder %s268, %s269
      %p281 = scmp.eq.s32.totalorder %s28, 1
      %p282 = por %p280, %p281
      %p284 = scmp.ne.s32.totalorder %s269, %s283
      %p285 = scmp.eq.s32.totalorder %s28, 0
      %p286 = por %p284, %p285
      %s288 = sadd.s32 %s287, 1
      %p291 = scmp.eq.s32.totalorder %s22, 1
      %p292 = scmp.ne.s32.totalorder %s287, %s289
      %p293 = scmp.eq.s32.totalorder %s22, 0
      %p294 = por %p292, %p293
      %p295 = scmp.ne.s32.totalorder %s287, %s289
      %p296 = scmp.eq.s32.totalorder %s27, 1
      %p297 = por %p295, %p296
      %p298 = scmp.ne.s32.totalorder %s289, %s290
      %p299 = scmp.eq.s32.totalorder %s27, 0
      %p300 = por %p298, %p299
      %p301 = scmp.ne.s32.totalorder %s289, %s290
      %p302 = scmp.eq.s32.totalorder %s28, 1
      %p303 = por %p301, %p302
      %p305 = scmp.ne.s32.totalorder %s290, %s304
      %p306 = scmp.eq.s32.totalorder %s28, 0
      %p307 = por %p305, %p306
      %s308 = ssub.s32 %s22, %s29
      %p309 = scmp.eq.s32.totalorder %s308, 0
      %s311 = sadd.s32 %s310, 1
      %s312 = scalar_select %p309, %s310, %s311
      %p315 = pneg %p309
      %p316 = scmp.eq.s32.totalorder %s22, 1
      %p317 = por %p315, %p316
      %p318 = scmp.ne.s32.totalorder %s310, %s313
      %p319 = scmp.eq.s32.totalorder %s22, 0
      %p320 = por %p318, %p319
      %p321 = scmp.ne.s32.totalorder %s310, %s313
      %p322 = scmp.eq.s32.totalorder %s27, 1
      %p323 = por %p321, %p322
      %p324 = scmp.ne.s32.totalorder %s313, %s314
      %p325 = scmp.eq.s32.totalorder %s27, 0
      %p326 = por %p324, %p325
      %p327 = scmp.ne.s32.totalorder %s313, %s314
      %p328 = scmp.eq.s32.totalorder %s28, 1
      %p329 = por %p327, %p328
      %p331 = scmp.ne.s32.totalorder %s314, %s330
      %p332 = scmp.eq.s32.totalorder %s28, 0
      %p333 = por %p331, %p332
      %p334 = scmp.le.s32.totalorder 1, %s22
      %p335 = scmp.lt.s32.totalorder %s22, 3
      %p336 = pnand %p334, %p335
      %p337 = pneg %p336
      // Predicated region
      $region9: #{tpu_custom_call.1} parent=5 // pred_check
        _
      $region10: #{tpu_custom_call.1} parent=5 // pred_check_branch
        %339 = sbr.rel (%p336) target = $region12
      $region11: #{tpu_custom_call.1} parent=5 // pred_region
        %s340 = ssub.s32 %s22, 1
        // Predicated region
        $region13: #{tpu_custom_call.1} parent=11 // pred_check
          %p341 = pneg %p69
        $region14: #{tpu_custom_call.1} parent=11 // pred_check_branch
          %343 = sbr.rel (%p341) target = $region16
        $region15: #{tpu_custom_call.1} parent=11 // pred_region
          _
        $region16: #{tpu_custom_call.1} parent=11 // pred_fallthru
          _
        // Predicated region
        $region17: #{tpu_custom_call.1} parent=11 // pred_check
          %p344 = pneg %p90
        $region18: #{tpu_custom_call.1} parent=11 // pred_check_branch
          %346 = sbr.rel (%p344) target = $region20
        $region19: #{tpu_custom_call.1} parent=11 // pred_region
          _
        $region20: #{tpu_custom_call.1} parent=11 // pred_fallthru
          _
        // Predicated region
        $region21: #{tpu_custom_call.1} parent=11 // pred_check
          %p347 = pneg %p111
        $region22: #{tpu_custom_call.1} parent=11 // pred_check_branch
          %349 = sbr.rel (%p347) target = $region24
        $region23: #{tpu_custom_call.1} parent=11 // pred_region
          _
        $region24: #{tpu_custom_call.1} parent=11 // pred_fallthru
          _
        // Predicated region
        $region25: #{tpu_custom_call.1} parent=11 // pred_check
          %p350 = pneg %p132
        $region26: #{tpu_custom_call.1} parent=11 // pred_check_branch
          %352 = sbr.rel (%p350) target = $region28
        $region27: #{tpu_custom_call.1} parent=11 // pred_region
          _
        $region28: #{tpu_custom_call.1} parent=11 // pred_fallthru
          _
        // Predicated region
        $region29: #{tpu_custom_call.1} parent=11 // pred_check
          %p353 = pneg %p153
        $region30: #{tpu_custom_call.1} parent=11 // pred_check_branch
          %355 = sbr.rel (%p353) target = $region32
        $region31: #{tpu_custom_call.1} parent=11 // pred_region
          _
        $region32: #{tpu_custom_call.1} parent=11 // pred_fallthru
          _
        // Predicated region
        $region33: #{tpu_custom_call.1} parent=11 // pred_check
          %p356 = pneg %p174
        $region34: #{tpu_custom_call.1} parent=11 // pred_check_branch
          %358 = sbr.rel (%p356) target = $region36
        $region35: #{tpu_custom_call.1} parent=11 // pred_region
          _
        $region36: #{tpu_custom_call.1} parent=11 // pred_fallthru
          _
        // Predicated region
        $region37: #{tpu_custom_call.1} parent=11 // pred_check
          %p359 = pneg %p195
        $region38: #{tpu_custom_call.1} parent=11 // pred_check_branch
          %361 = sbr.rel (%p359) target = $region40
        $region39: #{tpu_custom_call.1} parent=11 // pred_region
          _
        $region40: #{tpu_custom_call.1} parent=11 // pred_fallthru
          _
        // Predicated region
        $region41: #{tpu_custom_call.1} parent=11 // pred_check
          %p362 = pneg %p216
        $region42: #{tpu_custom_call.1} parent=11 // pred_check_branch
          %364 = sbr.rel (%p362) target = $region44
        $region43: #{tpu_custom_call.1} parent=11 // pred_region
          _
        $region44: #{tpu_custom_call.1} parent=11 // pred_fallthru
          _
        // Predicated region
        $region45: #{tpu_custom_call.1} parent=11 // pred_check
          %p365 = pneg %p237
        $region46: #{tpu_custom_call.1} parent=11 // pred_check_branch
          %367 = sbr.rel (%p365) target = $region48
        $region47: #{tpu_custom_call.1} parent=11 // pred_region
          _
        $region48: #{tpu_custom_call.1} parent=11 // pred_fallthru
          _
        // Predicated region
        $region49: #{tpu_custom_call.1} parent=11 // pred_check
          %p368 = pneg %p258
        $region50: #{tpu_custom_call.1} parent=11 // pred_check_branch
          %370 = sbr.rel (%p368) target = $region52
        $region51: #{tpu_custom_call.1} parent=11 // pred_region
          _
        $region52: #{tpu_custom_call.1} parent=11 // pred_fallthru
          _
        // Predicated region
        $region53: #{tpu_custom_call.1} parent=11 // pred_check
          %p371 = pneg %p279
        $region54: #{tpu_custom_call.1} parent=11 // pred_check_branch
          %373 = sbr.rel (%p371) target = $region56
        $region55: #{tpu_custom_call.1} parent=11 // pred_region
          _
        $region56: #{tpu_custom_call.1} parent=11 // pred_fallthru
          _
        // Predicated region
        $region57: #{tpu_custom_call.1} parent=11 // pred_check
          %p374 = pneg %p300
        $region58: #{tpu_custom_call.1} parent=11 // pred_check_branch
          %376 = sbr.rel (%p374) target = $region60
        $region59: #{tpu_custom_call.1} parent=11 // pred_region
          _
        $region60: #{tpu_custom_call.1} parent=11 // pred_fallthru
          _
      $region12: #{tpu_custom_call.1} parent=5 // pred_fallthru
        _
      %p377 = scmp.lt.s32.totalorder %s22, 2
      // Predicated region
      $region61: #{tpu_custom_call.1} parent=5 // pred_check
        %p378 = pneg %p377
      $region62: #{tpu_custom_call.1} parent=5 // pred_check_branch
        %380 = sbr.rel (%p378) target = $region64
      $region63: #{tpu_custom_call.1} parent=5 // pred_region
        // Predicated region
        $region65: #{tpu_custom_call.1} parent=63 // pred_check
          %p381 = pneg %p42
        $region66: #{tpu_custom_call.1} parent=63 // pred_check_branch
          %383 = sbr.rel (%p381) target = $region68
        $region67: #{tpu_custom_call.1} parent=63 // pred_region
          %p384 = scmp.lt.s32.totalorder %s22, 1
          %s385 = scalar_select %p384, %s22, 1
          %s386 = smul.addr %s385, 4
          %s387 = scalar_lea.vmem %s0, %s386
        $region68: #{tpu_custom_call.1} parent=63 // pred_fallthru
          _
      $region64: #{tpu_custom_call.1} parent=5 // pred_fallthru
        _
      %p388 = scmp.le.s32.totalorder 1, %s22
      %p389 = scmp.lt.s32.totalorder %s22, 3
      %p390 = pnand %p388, %p389
      %p391 = pneg %p390
      // Predicated region
      $region69: #{tpu_custom_call.1} parent=5 // pred_check
        _
      $region70: #{tpu_custom_call.1} parent=5 // pred_check_branch
        %393 = sbr.rel (%p390) target = $region72
      $region71: #{tpu_custom_call.1} parent=5 // pred_region
        %s394 = ssub.s32 %s22, 1
        %p395 = scmp.lt.s32.totalorder %s27, 1
        %s396 = scalar_select %p395, %s27, 1
        %s397 = smul.addr %s396, 4
        %s398 = scalar_lea.vmem %s0, %s397
        %p399 = pneg %p48
        %p400 = pneg %p45
        %p401 = pneg %p69
        %p402 = pneg %p66
        %p403 = pneg %p90
        %p404 = pneg %p87
        %p405 = pneg %p111
        %p406 = pneg %p108
        %p407 = pneg %p132
        %p408 = pneg %p129
        %p409 = pneg %p153
        %p410 = pneg %p150
        %p411 = pneg %p174
        %p412 = pneg %p171
        %p413 = pneg %p195
        %p414 = pneg %p192
        %p415 = pneg %p216
        %p416 = pneg %p213
        %p417 = pneg %p237
        %p418 = pneg %p234
        %p419 = pneg %p258
        %p420 = pneg %p255
        %p421 = pneg %p279
        %p422 = pneg %p276
        %p423 = pneg %p300
        %p424 = pneg %p297
        %p425 = pneg %p326
        %p426 = pneg %p323
        %s427 = sand.u32 %s313, 1
        %s428 = scalar_lea.sflag [#allocation3], %s427
        %s429 = sand.u32 %s313, 1
        %s430 = smul.addr %s429, 8
        %s431 = scalar_lea.vmem [#allocation2], %s430
        %p432 = scmp.lt.s32.totalorder %s27, 1
        %s433 = scalar_select %p432, %s27, 1
        %s434 = smul.addr %s433, 4
        %s435 = scalar_lea.vmem %s0, %s434
        %v436 = vld [vmem:[%s435] sm:$0xf]
        %v437 = vld [vmem:[%s1] sm:$0xff]
        %439 = vrot.lane.b32.xlu0 %v436, 3
        %v440 = vpop.permute.xlu0 %439
        %vm442 = vcmask 23552
        %v443 = vsel %vm442, 0.0, %v440
        %vm444 = vcmask 154624
        %v445 = vsel %vm444, %v443, 0.0
        %v447 = vrot.slane %v445, 4
        %448 = vrot.lane.b32.xlu0 %v447, 127
        %v449 = vpop.permute.xlu0 %448
        %451 = vrot.lane.b32.xlu0 %v445, 126
        %v452 = vpop.permute.xlu0 %451
        %454 = vrot.lane.b32.xlu0 %v447, 125
        %v455 = vpop.permute.xlu0 %454
        %457 = vrot.lane.b32.xlu0 %v445, 124
        %v458 = vpop.permute.xlu0 %457
        %460 = vrot.lane.b32.xlu0 %v447, 123
        %v461 = vpop.permute.xlu0 %460
        %463 = vrot.lane.b32.xlu0 %v445, 122
        %v464 = vpop.permute.xlu0 %463
        %vm465 = vcmask 1043456
        %v466 = vsel %vm465, %v445, %v449
        %v467 = vsel %vm465, %v452, %v455
        %v468 = vsel %vm465, %v458, %v461
        %vm469 = vcmask 228352
        %v471 = vsel %vm469, %v437, 0
        %v473 = vsel %vm465, %v464, 0
        %475 = vmatprep.subr.mxu0 0.0
        %476 = vmatpush1.msra.mxu0 0.0
        %477 = vmatprep.subr.mxu0 0.0
        %478 = vmatpush1.msra.mxu0 0.0
        %479 = vmatprep.subr.mxu0 0.0
        %480 = vmatpush1.msra.mxu0 0.0
        %481 = vmatprep.subr.mxu0 0.0
        %482 = vmatpush1.msra.mxu0 0.0
        %483 = vmatprep.subr.mxu0 0.0
        %484 = vmatpush1.msra.mxu0 0.0
        %485 = vmatprep.subr.mxu0 0.0
        %486 = vmatpush1.msra.mxu0 0.0
        %487 = vmatprep.subr.mxu0 0.0
        %488 = vmatpush1.msra.mxu0 0.0
        %489 = vmatprep.subr.mxu0 0.0
        %490 = vmatpush1.msra.mxu0 0.0
        %491 = vmatprep.subr.mxu0 0.0
        %492 = vmatpush1.msra.mxu0 0.0
        %493 = vmatprep.subr.mxu0 0.0
        %494 = vmatpush1.msra.mxu0 0.0
        %495 = vmatprep.subr.mxu0 0.0
        %496 = vmatpush1.msra.mxu0 0.0
        %497 = vmatprep.subr.mxu0 0.0
        %498 = vmatpush1.msra.mxu0 0.0
        %499 = vmatprep.subr.mxu0 0.0
        %500 = vmatpush1.msra.mxu0 %v473
        %501 = vmatprep.subr.mxu0 0.0
        %502 = vmatpush1.msra.mxu0 %v468
        %503 = vmatprep.subr.mxu0 0.0
        %504 = vmatpush1.msra.mxu0 %v467
        %505 = vmatprep.subr.mxu0 0.0
        %506 = vmatpush1.msra.mxu0 %v466
        %507 = vmatprep.subr.mxu0 0.0
        %508 = vmatpush2.msra.mxu0 0.0
        %509 = vmatprep.subr.mxu0 0.0
        %510 = vmatpush2.msra.mxu0 0.0
        %511 = vmatprep.subr.mxu0 0.0
        %512 = vmatpush2.msra.mxu0 0.0
        %513 = vmatprep.subr.mxu0 0.0
        %514 = vmatpush2.msra.mxu0 0.0
        %515 = vmatprep.subr.mxu0 0.0
        %516 = vmatpush2.msra.mxu0 0.0
        %517 = vmatprep.subr.mxu0 0.0
        %518 = vmatpush2.msra.mxu0 0.0
        %519 = vmatprep.subr.mxu0 0.0
        %520 = vmatpush2.msra.mxu0 0.0
        %521 = vmatprep.subr.mxu0 0.0
        %522 = vmatpush2.msra.mxu0 0.0
        %523 = vmatprep.subr.mxu0 0.0
        %524 = vmatpush2.msra.mxu0 0.0
        %525 = vmatprep.subr.mxu0 0.0
        %526 = vmatpush2.msra.mxu0 0.0
        %527 = vmatprep.subr.mxu0 0.0
        %528 = vmatpush2.msra.mxu0 0.0
        %529 = vmatprep.subr.mxu0 0.0
        %530 = vmatpush2.msra.mxu0 0.0
        %531 = vmatprep.subr.mxu0 0.0
        %532 = vmatpush2.msra.mxu0 0.0
        %533 = vmatprep.subr.mxu0 0.0
        %534 = vmatpush2.msra.mxu0 0.0
        %535 = vmatprep.subr.mxu0 0.0
        %536 = vmatpush2.msra.mxu0 0.0
        %537 = vmatprep.subr.mxu0 0.0
        %538 = vmatpush2.msra.mxu0 0.0
        %539 = vmatprep.mubr.f32.mxu0 0.0
        %540 = vmatmul.mubr.f32.gmra.mxu0 %v471
        %v541 = vpop.f32.mrf.mxu0
        %v542 = vadd.f32 0.0, %v541
        %v543 = vpop.f32.mrf.mxu0
        %544 = vdwg.mxu0
        %v545 = vld [vmem:[%s2] sm:$0xff]
        %547 = vset.pattern.permute.xlu0 0
        %548 = vperm.xlu0 %547, %v545
        %v549 = vpop.permute.xlu0 %548
        %v551 = vmul.f32 %v542, %v549
        %v552 = vld [vmem:[%s3] sm:$0xff]
        %554 = vset.pattern.permute.xlu0 0
        %555 = vperm.xlu0 %554, %v552
        %v556 = vpop.permute.xlu0 %555
        %v558 = vadd.f32 %v551, %v556
        %v559 = vmax.f32 %v558, 0.0
        %v560 = vld [vmem:[%s4] sm:$0xff]
        %v561 = vlaneseq
        %v562 = vshrl.u32 %v561, 7
        %v563 = vadd.s32 %v562, 8
        %v564 = vlaneseq
        %v565 = vand.u32 %v564, 127
        %v566 = vmul.u32 %v562, 2
        %v567 = vmul.u32 %v563, 2
        %v568 = vadd.s32 %v566, 5
        %v569 = vadd.s32 %v567, 5
        %vm570 = vcmp.eq.s32.totalorder %v565, %v568
        %vm571 = vcmp.eq.s32.totalorder %v565, %v569
        %v572 = vsel %vm570, 1, 0
        %v573 = vsel %vm571, 1, 0
        %v574 = vcvt.s32.f32 %v572
        %v575 = vcvt.s32.f32 %v573
        %vm576 = vcmask 130048
        %v578 = vsel %vm576, %v559, 0
        %580 = vmatprep.subr.mxu0 0.0
        %581 = vmatpush1.msra.mxu0 0.0
        %582 = vmatprep.subr.mxu0 0.0
        %583 = vmatpush1.msra.mxu0 0.0
        %584 = vmatprep.subr.mxu0 0.0
        %585 = vmatpush1.msra.mxu0 0.0
        %586 = vmatprep.subr.mxu0 0.0
        %587 = vmatpush1.msra.mxu0 0.0
        %588 = vmatprep.subr.mxu0 0.0
        %589 = vmatpush1.msra.mxu0 0.0
        %590 = vmatprep.subr.mxu0 0.0
        %591 = vmatpush1.msra.mxu0 0.0
        %592 = vmatprep.subr.mxu0 0.0
        %593 = vmatpush1.msra.mxu0 0.0
        %594 = vmatprep.subr.mxu0 0.0
        %595 = vmatpush1.msra.mxu0 0.0
        %596 = vmatprep.subr.mxu0 0.0
        %597 = vmatpush1.msra.mxu0 0.0
        %598 = vmatprep.subr.mxu0 0.0
        %599 = vmatpush1.msra.mxu0 0.0
        %600 = vmatprep.subr.mxu0 0.0
        %601 = vmatpush1.msra.mxu0 0.0
        %602 = vmatprep.subr.mxu0 0.0
        %603 = vmatpush1.msra.mxu0 0.0
        %604 = vmatprep.subr.mxu0 0.0
        %605 = vmatpush1.msra.mxu0 0.0
        %606 = vmatprep.subr.mxu0 0.0
        %607 = vmatpush1.msra.mxu0 0.0
        %608 = vmatprep.subr.mxu0 0.0
        %609 = vmatpush1.msra.mxu0 %v575
        %610 = vmatprep.subr.mxu0 0.0
        %611 = vmatpush1.msra.mxu0 %v574
        %612 = vmatprep.subr.mxu0 0.0
        %613 = vmatpush2.msra.mxu0 0.0
        %614 = vmatprep.subr.mxu0 0.0
        %615 = vmatpush2.msra.mxu0 0.0
        %616 = vmatprep.subr.mxu0 0.0
        %617 = vmatpush2.msra.mxu0 0.0
        %618 = vmatprep.subr.mxu0 0.0
        %619 = vmatpush2.msra.mxu0 0.0
        %620 = vmatprep.subr.mxu0 0.0
        %621 = vmatpush2.msra.mxu0 0.0
        %622 = vmatprep.subr.mxu0 0.0
        %623 = vmatpush2.msra.mxu0 0.0
        %624 = vmatprep.subr.mxu0 0.0
        %625 = vmatpush2.msra.mxu0 0.0
        %626 = vmatprep.subr.mxu0 0.0
        %627 = vmatpush2.msra.mxu0 0.0
        %628 = vmatprep.subr.mxu0 0.0
        %629 = vmatpush2.msra.mxu0 0.0
        %630 = vmatprep.subr.mxu0 0.0
        %631 = vmatpush2.msra.mxu0 0.0
        %632 = vmatprep.subr.mxu0 0.0
        %633 = vmatpush2.msra.mxu0 0.0
        %634 = vmatprep.subr.mxu0 0.0
        %635 = vmatpush2.msra.mxu0 0.0
        %636 = vmatprep.subr.mxu0 0.0
        %637 = vmatpush2.msra.mxu0 0.0
        %638 = vmatprep.subr.mxu0 0.0
        %639 = vmatpush2.msra.mxu0 0.0
        %640 = vmatprep.subr.mxu0 0.0
        %641 = vmatpush2.msra.mxu0 0.0
        %642 = vmatprep.subr.mxu0 0.0
        %643 = vmatpush2.msra.mxu0 0.0
        %644 = vmatprep.mubr.f32.mxu0 0.0
        %645 = vmatmul.mubr.f32.gmra.mxu0 %v578
        %v646 = vpop.f32.mrf.mxu0
        %v647 = vadd.f32 0.0, %v646
        %v648 = vpop.f32.mrf.mxu0
        %649 = vdwg.mxu0
        %651 = vrot.lane.b32.xlu0 %v647, 127
        %v652 = vpop.permute.xlu0 %651
        %654 = vrot.lane.b32.xlu0 %v647, 126
        %v655 = vpop.permute.xlu0 %654
        %657 = vrot.lane.b32.xlu0 %v647, 125
        %v658 = vpop.permute.xlu0 %657
        %660 = vrot.lane.b32.xlu0 %v647, 124
        %v661 = vpop.permute.xlu0 %660
        %663 = vrot.lane.b32.xlu0 %v647, 123
        %v664 = vpop.permute.xlu0 %663
        %666 = vrot.lane.b32.xlu0 %v647, 122
        %v667 = vpop.permute.xlu0 %666
        %669 = vrot.lane.b32.xlu0 %v647, 121
        %v670 = vpop.permute.xlu0 %669
        %672 = vrot.lane.b32.xlu0 %v647, 120
        %v673 = vpop.permute.xlu0 %672
        %675 = vrot.lane.b32.xlu0 %v647, 119
        %v676 = vpop.permute.xlu0 %675
        %678 = vrot.lane.b32.xlu0 %v647, 118
        %v679 = vpop.permute.xlu0 %678
        %vm681 = vcmask 719872
        %v683 = vsel %vm681, %v560, 0
        %685 = vmatprep.subr.mxu0 0.0
        %686 = vmatpush1.msra.mxu0 0.0
        %687 = vmatprep.subr.mxu0 0.0
        %688 = vmatpush1.msra.mxu0 0.0
        %689 = vmatprep.subr.mxu0 0.0
        %690 = vmatpush1.msra.mxu0 0.0
        %691 = vmatprep.subr.mxu0 0.0
        %692 = vmatpush1.msra.mxu0 0.0
        %693 = vmatprep.subr.mxu0 0.0
        %694 = vmatpush1.msra.mxu0 0.0
        %695 = vmatprep.subr.mxu0 0.0
        %696 = vmatpush1.msra.mxu0 %v679
        %697 = vmatprep.subr.mxu0 0.0
        %698 = vmatpush1.msra.mxu0 %v676
        %699 = vmatprep.subr.mxu0 0.0
        %700 = vmatpush1.msra.mxu0 %v673
        %701 = vmatprep.subr.mxu0 0.0
        %702 = vmatpush1.msra.mxu0 %v670
        %703 = vmatprep.subr.mxu0 0.0
        %704 = vmatpush1.msra.mxu0 %v667
        %705 = vmatprep.subr.mxu0 0.0
        %706 = vmatpush1.msra.mxu0 %v664
        %707 = vmatprep.subr.mxu0 0.0
        %708 = vmatpush1.msra.mxu0 %v661
        %709 = vmatprep.subr.mxu0 0.0
        %710 = vmatpush1.msra.mxu0 %v658
        %711 = vmatprep.subr.mxu0 0.0
        %712 = vmatpush1.msra.mxu0 %v655
        %713 = vmatprep.subr.mxu0 0.0
        %714 = vmatpush1.msra.mxu0 %v652
        %715 = vmatprep.subr.mxu0 0.0
        %716 = vmatpush1.msra.mxu0 %v647
        %717 = vmatprep.subr.mxu0 0.0
        %718 = vmatpush2.msra.mxu0 0.0
        %719 = vmatprep.subr.mxu0 0.0
        %720 = vmatpush2.msra.mxu0 0.0
        %721 = vmatprep.subr.mxu0 0.0
        %722 = vmatpush2.msra.mxu0 0.0
        %723 = vmatprep.subr.mxu0 0.0
        %724 = vmatpush2.msra.mxu0 0.0
        %725 = vmatprep.subr.mxu0 0.0
        %726 = vmatpush2.msra.mxu0 0.0
        %727 = vmatprep.subr.mxu0 0.0
        %728 = vmatpush2.msra.mxu0 0.0
        %729 = vmatprep.subr.mxu0 0.0
        %730 = vmatpush2.msra.mxu0 0.0
        %731 = vmatprep.subr.mxu0 0.0
        %732 = vmatpush2.msra.mxu0 0.0
        %733 = vmatprep.subr.mxu0 0.0
        %734 = vmatpush2.msra.mxu0 0.0
        %735 = vmatprep.subr.mxu0 0.0
        %736 = vmatpush2.msra.mxu0 0.0
        %737 = vmatprep.subr.mxu0 0.0
        %738 = vmatpush2.msra.mxu0 0.0
        %739 = vmatprep.subr.mxu0 0.0
        %740 = vmatpush2.msra.mxu0 0.0
        %741 = vmatprep.subr.mxu0 0.0
        %742 = vmatpush2.msra.mxu0 0.0
        %743 = vmatprep.subr.mxu0 0.0
        %744 = vmatpush2.msra.mxu0 0.0
        %745 = vmatprep.subr.mxu0 0.0
        %746 = vmatpush2.msra.mxu0 0.0
        %747 = vmatprep.subr.mxu0 0.0
        %748 = vmatpush2.msra.mxu0 0.0
        %749 = vmatprep.mubr.f32.mxu0 0.0
        %750 = vmatmul.mubr.f32.gmra.mxu0 %v683
        %v751 = vpop.f32.mrf.mxu0
        %v752 = vadd.f32 0.0, %v751
        %v753 = vpop.f32.mrf.mxu0
        %754 = vdwg.mxu0
        %v755 = vld [vmem:[%s5] sm:$0xff]
        %757 = vset.pattern.permute.xlu0 0
        %758 = vperm.xlu0 %757, %v755
        %v759 = vpop.permute.xlu0 %758
        %v761 = vmul.f32 %v752, %v759
        %v762 = vld [vmem:[%s6] sm:$0xff]
        %764 = vset.pattern.permute.xlu0 0
        %765 = vperm.xlu0 %764, %v762
        %v766 = vpop.permute.xlu0 %765
        %v768 = vadd.f32 %v761, %v766
        %v769 = vmax.f32 %v768, 0.0
        %v770 = vld [vmem:[%s7] sm:$0xff]
        %772 = vrot.lane.b32.xlu0 %v769, 3
        %v773 = vpop.permute.xlu0 %772
        %v775 = vsel %vm442, 0.0, %v773
        %vm776 = vcmask 285696
        %v777 = vsel %vm776, %v775, 0.0
        %779 = vrot.lane.b32.xlu0 %v777, 127
        %v780 = vpop.permute.xlu0 %779
        %782 = vrot.lane.b32.xlu0 %v777, 126
        %v783 = vpop.permute.xlu0 %782
        %785 = vrot.lane.b32.xlu0 %v777, 125
        %v786 = vpop.permute.xlu0 %785
        %788 = vrot.lane.b32.xlu0 %v777, 124
        %v789 = vpop.permute.xlu0 %788
        %791 = vrot.lane.b32.xlu0 %v777, 123
        %v792 = vpop.permute.xlu0 %791
        %794 = vrot.lane.b32.xlu0 %v777, 122
        %v795 = vpop.permute.xlu0 %794
        %vm797 = vcmask 457728
        %v799 = vsel %vm797, %v770, 0
        %801 = vmatprep.subr.mxu0 0.0
        %802 = vmatpush1.msra.mxu0 0.0
        %803 = vmatprep.subr.mxu0 0.0
        %804 = vmatpush1.msra.mxu0 0.0
        %805 = vmatprep.subr.mxu0 0.0
        %806 = vmatpush1.msra.mxu0 0.0
        %807 = vmatprep.subr.mxu0 0.0
        %808 = vmatpush1.msra.mxu0 0.0
        %809 = vmatprep.subr.mxu0 0.0
        %810 = vmatpush1.msra.mxu0 0.0
        %811 = vmatprep.subr.mxu0 0.0
        %812 = vmatpush1.msra.mxu0 0.0
        %813 = vmatprep.subr.mxu0 0.0
        %814 = vmatpush1.msra.mxu0 0.0
        %815 = vmatprep.subr.mxu0 0.0
        %816 = vmatpush1.msra.mxu0 0.0
        %817 = vmatprep.subr.mxu0 0.0
        %818 = vmatpush1.msra.mxu0 0.0
        %819 = vmatprep.subr.mxu0 0.0
        %820 = vmatpush1.msra.mxu0 %v795
        %821 = vmatprep.subr.mxu0 0.0
        %822 = vmatpush1.msra.mxu0 %v792
        %823 = vmatprep.subr.mxu0 0.0
        %824 = vmatpush1.msra.mxu0 %v789
        %825 = vmatprep.subr.mxu0 0.0
        %826 = vmatpush1.msra.mxu0 %v786
        %827 = vmatprep.subr.mxu0 0.0
        %828 = vmatpush1.msra.mxu0 %v783
        %829 = vmatprep.subr.mxu0 0.0
        %830 = vmatpush1.msra.mxu0 %v780
        %831 = vmatprep.subr.mxu0 0.0
        %832 = vmatpush1.msra.mxu0 %v777
        %833 = vmatprep.subr.mxu0 0.0
        %834 = vmatpush2.msra.mxu0 0.0
        %835 = vmatprep.subr.mxu0 0.0
        %836 = vmatpush2.msra.mxu0 0.0
        %837 = vmatprep.subr.mxu0 0.0
        %838 = vmatpush2.msra.mxu0 0.0
        %839 = vmatprep.subr.mxu0 0.0
        %840 = vmatpush2.msra.mxu0 0.0
        %841 = vmatprep.subr.mxu0 0.0
        %842 = vmatpush2.msra.mxu0 0.0
        %843 = vmatprep.subr.mxu0 0.0
        %844 = vmatpush2.msra.mxu0 0.0
        %845 = vmatprep.subr.mxu0 0.0
        %846 = vmatpush2.msra.mxu0 0.0
        %847 = vmatprep.subr.mxu0 0.0
        %848 = vmatpush2.msra.mxu0 0.0
        %849 = vmatprep.subr.mxu0 0.0
        %850 = vmatpush2.msra.mxu0 0.0
        %851 = vmatprep.subr.mxu0 0.0
        %852 = vmatpush2.msra.mxu0 0.0
        %853 = vmatprep.subr.mxu0 0.0
        %854 = vmatpush2.msra.mxu0 0.0
        %855 = vmatprep.subr.mxu0 0.0
        %856 = vmatpush2.msra.mxu0 0.0
        %857 = vmatprep.subr.mxu0 0.0
        %858 = vmatpush2.msra.mxu0 0.0
        %859 = vmatprep.subr.mxu0 0.0
        %860 = vmatpush2.msra.mxu0 0.0
        %861 = vmatprep.subr.mxu0 0.0
        %862 = vmatpush2.msra.mxu0 0.0
        %863 = vmatprep.subr.mxu0 0.0
        %864 = vmatpush2.msra.mxu0 0.0
        %865 = vmatprep.mubr.f32.mxu0 0.0
        %866 = vmatmul.mubr.f32.gmra.mxu0 %v799
        %v867 = vpop.f32.mrf.mxu0
        %v868 = vadd.f32 0.0, %v867
        %v869 = vpop.f32.mrf.mxu0
        %870 = vdwg.mxu0
        %v871 = vld [vmem:[%s8] sm:$0xff]
        %873 = vset.pattern.permute.xlu0 0
        %874 = vperm.xlu0 %873, %v871
        %v875 = vpop.permute.xlu0 %874
        %v877 = vmul.f32 %v868, %v875
        %v878 = vld [vmem:[%s9] sm:$0xff]
        %880 = vset.pattern.permute.xlu0 0
        %881 = vperm.xlu0 %880, %v878
        %v882 = vpop.permute.xlu0 %881
        %v884 = vadd.f32 %v877, %v882
        %v885 = vld [vmem:[%s10] sm:$0xff]
        %vm886 = vcmp.eq.s32.totalorder %v565, %v566
        %vm887 = vcmp.eq.s32.totalorder %v565, %v567
        %v888 = vsel %vm886, 1, 0
        %v889 = vsel %vm887, 1, 0
        %v890 = vcvt.s32.f32 %v888
        %v891 = vcvt.s32.f32 %v889
        %v892 = vsel %vm576, %v436, 0
        %894 = vmatprep.subr.mxu0 0.0
        %895 = vmatpush1.msra.mxu0 0.0
        %896 = vmatprep.subr.mxu0 0.0
        %897 = vmatpush1.msra.mxu0 0.0
        %898 = vmatprep.subr.mxu0 0.0
        %899 = vmatpush1.msra.mxu0 0.0
        %900 = vmatprep.subr.mxu0 0.0
        %901 = vmatpush1.msra.mxu0 0.0
        %902 = vmatprep.subr.mxu0 0.0
        %903 = vmatpush1.msra.mxu0 0.0
        %904 = vmatprep.subr.mxu0 0.0
        %905 = vmatpush1.msra.mxu0 0.0
        %906 = vmatprep.subr.mxu0 0.0
        %907 = vmatpush1.msra.mxu0 0.0
        %908 = vmatprep.subr.mxu0 0.0
        %909 = vmatpush1.msra.mxu0 0.0
        %910 = vmatprep.subr.mxu0 0.0
        %911 = vmatpush1.msra.mxu0 0.0
        %912 = vmatprep.subr.mxu0 0.0
        %913 = vmatpush1.msra.mxu0 0.0
        %914 = vmatprep.subr.mxu0 0.0
        %915 = vmatpush1.msra.mxu0 0.0
        %916 = vmatprep.subr.mxu0 0.0
        %917 = vmatpush1.msra.mxu0 0.0
        %918 = vmatprep.subr.mxu0 0.0
        %919 = vmatpush1.msra.mxu0 0.0
        %920 = vmatprep.subr.mxu0 0.0
        %921 = vmatpush1.msra.mxu0 0.0
        %922 = vmatprep.subr.mxu0 0.0
        %923 = vmatpush1.msra.mxu0 %v891
        %924 = vmatprep.subr.mxu0 0.0
        %925 = vmatpush1.msra.mxu0 %v890
        %926 = vmatprep.subr.mxu0 0.0
        %927 = vmatpush2.msra.mxu0 0.0
        %928 = vmatprep.subr.mxu0 0.0
        %929 = vmatpush2.msra.mxu0 0.0
        %930 = vmatprep.subr.mxu0 0.0
        %931 = vmatpush2.msra.mxu0 0.0
        %932 = vmatprep.subr.mxu0 0.0
        %933 = vmatpush2.msra.mxu0 0.0
        %934 = vmatprep.subr.mxu0 0.0
        %935 = vmatpush2.msra.mxu0 0.0
        %936 = vmatprep.subr.mxu0 0.0
        %937 = vmatpush2.msra.mxu0 0.0
        %938 = vmatprep.subr.mxu0 0.0
        %939 = vmatpush2.msra.mxu0 0.0
        %940 = vmatprep.subr.mxu0 0.0
        %941 = vmatpush2.msra.mxu0 0.0
        %942 = vmatprep.subr.mxu0 0.0
        %943 = vmatpush2.msra.mxu0 0.0
        %944 = vmatprep.subr.mxu0 0.0
        %945 = vmatpush2.msra.mxu0 0.0
        %946 = vmatprep.subr.mxu0 0.0
        %947 = vmatpush2.msra.mxu0 0.0
        %948 = vmatprep.subr.mxu0 0.0
        %949 = vmatpush2.msra.mxu0 0.0
        %950 = vmatprep.subr.mxu0 0.0
        %951 = vmatpush2.msra.mxu0 0.0
        %952 = vmatprep.subr.mxu0 0.0
        %953 = vmatpush2.msra.mxu0 0.0
        %954 = vmatprep.subr.mxu0 0.0
        %955 = vmatpush2.msra.mxu0 0.0
        %956 = vmatprep.subr.mxu0 0.0
        %957 = vmatpush2.msra.mxu0 0.0
        %958 = vmatprep.mubr.f32.mxu0 0.0
        %959 = vmatmul.mubr.f32.gmra.mxu0 %v892
        %v960 = vpop.f32.mrf.mxu0
        %v961 = vadd.f32 0.0, %v960
        %v962 = vpop.f32.mrf.mxu0
        %963 = vdwg.mxu0
        %vm964 = vcmask 31744
        %v966 = vsel %vm964, %v885, 0
        %v969 = vsel %vm465, %v961, 0
        %971 = vmatprep.subr.mxu0 0.0
        %972 = vmatpush1.msra.mxu0 0.0
        %973 = vmatprep.subr.mxu0 0.0
        %974 = vmatpush1.msra.mxu0 0.0
        %975 = vmatprep.subr.mxu0 0.0
        %976 = vmatpush1.msra.mxu0 0.0
        %977 = vmatprep.subr.mxu0 0.0
        %978 = vmatpush1.msra.mxu0 0.0
        %979 = vmatprep.subr.mxu0 0.0
        %980 = vmatpush1.msra.mxu0 0.0
        %981 = vmatprep.subr.mxu0 0.0
        %982 = vmatpush1.msra.mxu0 0.0
        %983 = vmatprep.subr.mxu0 0.0
        %984 = vmatpush1.msra.mxu0 0.0
        %985 = vmatprep.subr.mxu0 0.0
        %986 = vmatpush1.msra.mxu0 0.0
        %987 = vmatprep.subr.mxu0 0.0
        %988 = vmatpush1.msra.mxu0 0.0
        %989 = vmatprep.subr.mxu0 0.0
        %990 = vmatpush1.msra.mxu0 0.0
        %991 = vmatprep.subr.mxu0 0.0
        %992 = vmatpush1.msra.mxu0 0.0
        %993 = vmatprep.subr.mxu0 0.0
        %994 = vmatpush1.msra.mxu0 0.0
        %995 = vmatprep.subr.mxu0 0.0
        %996 = vmatpush1.msra.mxu0 0.0
        %997 = vmatprep.subr.mxu0 0.0
        %998 = vmatpush1.msra.mxu0 0.0
        %999 = vmatprep.subr.mxu0 0.0
        %1000 = vmatpush1.msra.mxu0 0.0
        %1001 = vmatprep.subr.mxu0 0.0
        %1002 = vmatpush1.msra.mxu0 %v969
        %1003 = vmatprep.subr.mxu0 0.0
        %1004 = vmatpush2.msra.mxu0 0.0
        %1005 = vmatprep.subr.mxu0 0.0
        %1006 = vmatpush2.msra.mxu0 0.0
        %1007 = vmatprep.subr.mxu0 0.0
        %1008 = vmatpush2.msra.mxu0 0.0
        %1009 = vmatprep.subr.mxu0 0.0
        %1010 = vmatpush2.msra.mxu0 0.0
        %1011 = vmatprep.subr.mxu0 0.0
        %1012 = vmatpush2.msra.mxu0 0.0
        %1013 = vmatprep.subr.mxu0 0.0
        %1014 = vmatpush2.msra.mxu0 0.0
        %1015 = vmatprep.subr.mxu0 0.0
        %1016 = vmatpush2.msra.mxu0 0.0
        %1017 = vmatprep.subr.mxu0 0.0
        %1018 = vmatpush2.msra.mxu0 0.0
        %1019 = vmatprep.subr.mxu0 0.0
        %1020 = vmatpush2.msra.mxu0 0.0
        %1021 = vmatprep.subr.mxu0 0.0
        %1022 = vmatpush2.msra.mxu0 0.0
        %1023 = vmatprep.subr.mxu0 0.0
        %1024 = vmatpush2.msra.mxu0 0.0
        %1025 = vmatprep.subr.mxu0 0.0
        %1026 = vmatpush2.msra.mxu0 0.0
        %1027 = vmatprep.subr.mxu0 0.0
        %1028 = vmatpush2.msra.mxu0 0.0
        %1029 = vmatprep.subr.mxu0 0.0
        %1030 = vmatpush2.msra.mxu0 0.0
        %1031 = vmatprep.subr.mxu0 0.0
        %1032 = vmatpush2.msra.mxu0 0.0
        %1033 = vmatprep.subr.mxu0 0.0
        %1034 = vmatpush2.msra.mxu0 0.0
        %1035 = vmatprep.mubr.f32.mxu0 0.0
        %1036 = vmatmul.mubr.f32.gmra.mxu0 %v966
        %v1037 = vpop.f32.mrf.mxu0
        %v1038 = vadd.f32 0.0, %v1037
        %v1039 = vpop.f32.mrf.mxu0
        %1040 = vdwg.mxu0
        %v1041 = vld [vmem:[%s11] sm:$0xff]
        %1043 = vset.pattern.permute.xlu0 0
        %1044 = vperm.xlu0 %1043, %v1041
        %v1045 = vpop.permute.xlu0 %1044
        %v1047 = vmul.f32 %v1038, %v1045
        %v1048 = vld [vmem:[%s12] sm:$0xff]
        %1050 = vset.pattern.permute.xlu0 0
        %1051 = vperm.xlu0 %1050, %v1048
        %v1052 = vpop.permute.xlu0 %1051
        %v1054 = vadd.f32 %v1047, %v1052
        %v1055 = vadd.f32 %v884, %v1054
        %v1056 = vmax.f32 %v1055, 0.0
        %vm1057 = vcmask 261120
        %1058 = vst.msk [vmem:[%s431] sm:$0xff] %vm1057, %v1056
        %s1059 = sand.u32 %s313, 1
        %s1060 = scalar_lea.sflag [#allocation3], %s1059
        %s1061 = sand.u32 %s313, 1
        %s1062 = smul.addr %s1061, 8
        %s1063 = scalar_lea.vmem [#allocation2], %s1062
        // Predicated region
        $region73: #{tpu_custom_call.1} parent=71 // pred_check
          %p1064 = pneg %p323
        $region74: #{tpu_custom_call.1} parent=71 // pred_check_branch
          %1066 = sbr.rel (%p1064) target = $region76
        $region75: #{tpu_custom_call.1} parent=71 // pred_region
          %s1068 = ssub.s32 128, 128
          %1069 = vsyncadd %s1060, %s1068
          %s1070 = smul.addr %s27, 128
          %s1071 = scalar_lea.hbm %s13, %s1070
          %s1073 = sshll.u32 %s1063, 4
          %s1074 = int_to_ptr.vmem [resolvable:$true] %s1073
          %1076 = dma.vmem_to_hbm [thread:$0]  %s1074, 128, %s1071, %s1060
        $region76: #{tpu_custom_call.1} parent=71 // pred_fallthru
          _
      $region72: #{tpu_custom_call.1} parent=5 // pred_fallthru
        _
      %p1077 = scmp.le.s32.totalorder 2, %s22
      // Predicated region
      $region77: #{tpu_custom_call.1} parent=5 // pred_check
        %p1078 = pneg %p1077
      $region78: #{tpu_custom_call.1} parent=5 // pred_check_branch
        %1080 = sbr.rel (%p1078) target = $region80
      $region79: #{tpu_custom_call.1} parent=5 // pred_region
        %s1081 = ssub.s32 %s22, 2
        // Predicated region
        $region81: #{tpu_custom_call.1} parent=79 // pred_check
          %p1082 = pneg %p329
        $region82: #{tpu_custom_call.1} parent=79 // pred_check_branch
          %1084 = sbr.rel (%p1082) target = $region84
        $region83: #{tpu_custom_call.1} parent=79 // pred_region
          %s1085 = sand.u32 %s314, 1
          %s1086 = scalar_lea.sflag [#allocation3], %s1085
          %s1087 = sand.u32 %s314, 1
          %s1088 = smul.addr %s1087, 8
          %s1089 = scalar_lea.vmem [#allocation2], %s1088
          %1090 = dma.done %s1086, 128
        $region84: #{tpu_custom_call.1} parent=79 // pred_fallthru
          _
      $region80: #{tpu_custom_call.1} parent=5 // pred_fallthru
        _
    $region6: #{tpu_custom_call.1} parent=1 // loop_footer
      %s26 = sadd.s32 1, %s22
    $region7: #{tpu_custom_call.1} parent=1 // loop_footer_branch
      %21 = sbr.rel target = $region3
    $region8: #{tpu_custom_call.1} parent=1 // loop_exit
      _
    %1091 = vsyncpa [#allocation3], 1
    %s1092 = scalar_lea.sflag [#allocation3], 1
    %1093 = vsyncpa %s1092, 1

</llo_original>
